<compile_context>
chip_gen: v6e
topology: v6e:2x2x1
jax: 0.10.0
libtpu: 0.0.40
codegen_flags: <defaults>
</compile_context>

<pallas_src>
import functools
import math

import jax
import jax.numpy as jnp
from jax import lax
from jax.experimental import pallas as pl
from jax.experimental.pallas import tpu as pltpu


_INV_SQRT2 = 1.0 / math.sqrt(2.0)


def _gelu_exact(x):
    # nn.GELU() default is approximate='none' -> exact erf formulation.
    return 0.5 * x * (1.0 + lax.erf(x * jnp.float32(_INV_SQRT2)))


def _round_up(v, m):
    return ((v + m - 1) // m) * m


def _hmlp_kernel(x_ref, w0t_ref, w1t_ref, w23t_ref, o_ref):
    # x_ref:    (tb, f_in)
    # w0t_ref:  (f_in, f_in)       == 2 * W0^T           (x + x folded in)
    # w1t_ref:  (f_in, 16)         == 0.5 * W1^T         (fc0-gelu's 0.5 folded in)
    # w23t_ref: (16, f_out_pad)    == 0.5 * (W3 @ W2)^T  (fc1-gelu's 0.5 folded in, 0-padded)
    inv_sqrt2 = jnp.float32(_INV_SQRT2)
    x = x_ref[...]

    # fc0: z0 == (x + x) @ W0^T ; h == 2*gelu(z0) (the 0.5 lives in w1_t).
    z0 = jnp.dot(x.astype(w0t_ref.dtype), w0t_ref[...],
                 preferred_element_type=jnp.float32)
    h = z0 * (1.0 + lax.erf(z0 * inv_sqrt2))

    # fc1: z1 == gelu(z0) @ W1^T ; t == 2*gelu(z1) (the 0.5 lives in w23_t).
    z1 = jnp.dot(h, w1t_ref[...], preferred_element_type=jnp.float32)
    t = z1 * (1.0 + lax.erf(z1 * inv_sqrt2))

    # fc2 + fc3 fused: z2 == gelu(z1) @ W2^T @ W3^T ; final exact GELU.
    z2 = jnp.dot(t, w23t_ref[...], preferred_element_type=jnp.float32)
    o_ref[...] = (0.5 * z2 * (1.0 + lax.erf(z2 * inv_sqrt2))).astype(o_ref.dtype)


def prepare_weights(w0, w1, w2, w3, *, fc0_bf16=False):
    """Once-per-model host-side weight prep (weights in PyTorch [out, in] layout)."""
    f_out = w3.shape[0]
    w0_t = 2.0 * w0.T              # [f_in, f_in]; folds x = x + x
    w1_t = 0.5 * w1.T              # [f_in, 16];   folds fc0-gelu's 0.5
    w23_t = 0.5 * (w3 @ w2).T      # [16, f_out];  fc2/fc3 fusion + fc1-gelu's 0.5
    # Lane-dense output: zero-pad W23^T columns to a multiple of 128 so stores are
    # unmasked full-lane vst's.  Padded outputs are gelu(0) == 0 and get sliced off.
    f_out_pad = _round_up(f_out, 128)
    if f_out_pad != f_out:
        w23_t = jnp.pad(w23_t, ((0, 0), (0, f_out_pad - f_out)))
    if fc0_bf16:
        # Optional (v6e/v7x, large f_in): run fc0's MXU contraction in bf16.
        w0_t = w0_t.astype(jnp.bfloat16)
    return w0_t, w1_t, w23_t


def _pick_batch_tile(batch, f_in, f_out_pad, tb):
    """Multiple-of-8 batch tile; >=2 grid blocks when possible; VMEM-safe."""
    if batch <= 8:
        return batch                    # single full-extent block
    # Keep double-buffered x/out tiles well inside VMEM (conservative 24 MiB cap).
    bytes_per_row = 2 * (f_in + f_out_pad) * 4
    max_rows = max(8, ((24 * 1024 * 1024) // bytes_per_row) // 8 * 8)
    tb = max(8, (min(tb, max_rows) // 8) * 8)
    if batch > tb:
        return tb
    # batch <= tb: split into two full-sublane blocks so dimension_semantics=("parallel",)
    # can shard the grid across both v7x TensorCores.
    half = _round_up(-(-batch // 2), 8)
    return half if half < batch else batch


def _vmem_budget(tb, f_in, hidden, f_out_pad):
    weights = (f_in * f_in + f_in * hidden + hidden * f_out_pad) * 4   # single-buffered
    streams = 2 * tb * (f_in + f_out_pad) * 4                          # double-buffered x/out
    interm = 4 * tb * max(f_in, f_out_pad) * 4                         # live f32 intermediates
    est = 2 * (weights + streams + interm)
    return int(min(48 * 1024 * 1024, max(32 * 1024 * 1024, est)))


def hierachical_mlp(x, w0_t, w1_t, w23_t, *, f_out, tb=2048):
    """x: [batch, f_in]; weights already prepared by prepare_weights()."""
    batch, f_in = x.shape
    hidden = w1_t.shape[1]
    f_out_pad = w23_t.shape[1]

    tb = _pick_batch_tile(batch, f_in, f_out_pad, tb)
    grid = (pl.cdiv(batch, tb),)

    out = pl.pallas_call(
        _hmlp_kernel,
        out_shape=jax.ShapeDtypeStruct((batch, f_out_pad), x.dtype),
        grid=grid,
        in_specs=[
            # x: tiled on batch (ragged last block handled by masked edge stores).
            pl.BlockSpec((tb, f_in), lambda i: (i, 0)),
            # Weights: VMEM-resident (constant index_map), single-buffered.
            pl.BlockSpec((f_in, f_in), lambda i: (0, 0), pipeline_mode=pl.Buffered(1)),
            pl.BlockSpec((f_in, hidden), lambda i: (0, 0), pipeline_mode=pl.Buffered(1)),
            pl.BlockSpec((hidden, f_out_pad), lambda i: (0, 0), pipeline_mode=pl.Buffered(1)),
        ],
        out_specs=pl.BlockSpec((tb, f_out_pad), lambda i: (i, 0)),
        compiler_params=pltpu.CompilerParams(
            dimension_semantics=("parallel",),
            vmem_limit_bytes=_vmem_budget(tb, f_in, hidden, f_out_pad),
        ),
    )(x, w0_t, w1_t, w23_t)

    if f_out_pad != f_out:
        out = out[:, :f_out]
    return out


def make_params(features_in, features_out, value, key):
    """Deterministic params mirroring the PyTorch module (all bias=False)."""
    k1, k2 = jax.random.split(key, 2)
    w0 = jnp.full((features_in, features_in), value, dtype=jnp.float32)    # fc0 (filled)
    w3 = jnp.full((features_out, features_out), value, dtype=jnp.float32)  # fc3 (filled)
    b1 = 1.0 / math.sqrt(features_in)
    w1 = jax.random.uniform(k1, (16, features_in), jnp.float32, -b1, b1)   # fc1
    b2 = 1.0 / math.sqrt(16)
    w2 = jax.random.uniform(k2, (features_out, 16), jnp.float32, -b2, b2)  # fc2
    return w0, w1, w2, w3


def _reference(x, w0, w1, w2, w3):
    # Un-fused, un-transposed reference matching the PyTorch forward exactly.
    x = x + x
    h = _gelu_exact(x @ w0.T)
    t = _gelu_exact(h @ w1.T)
    t = t @ w2.T
    return _gelu_exact(t @ w3.T)


if __name__ == "__main__":
    features_in = 32
    features_out = 32
    batch = 16          # two 8-row batch blocks -> exercises the grid / megacore path
    value = 0.01

    key = jax.random.PRNGKey(0)
    kx, kp = jax.random.split(key)
    x = jax.random.normal(kx, (batch, features_in), dtype=jnp.float32)
    w0, w1, w2, w3 = make_params(features_in, features_out, value, kp)

    # Weight prep is hoisted out of the per-call path (static weights).
    w0_t, w1_t, w23_t = prepare_weights(w0, w1, w2, w3)
    fwd = jax.jit(functools.partial(hierachical_mlp, f_out=features_out))

    out = fwd(x, w0_t, w1_t, w23_t)
    out = jax.block_until_ready(out)

    ref = _reference(x, w0, w1, w2, w3)
    assert out.shape == (batch, features_out)
    assert jnp.allclose(out, ref, atol=1e-5, rtol=1e-5), \
        float(jnp.max(jnp.abs(out - ref)))

    print("KERNEL_OK")
</pallas_src>

<mosaic_0001>
module attributes {stable_mosaic.version = 11 : i64} {
  func.func @_hmlp_kernel(%arg0: i32, %arg1: memref<8x32xf32, #tpu.memory_space<vmem>>, %arg2: memref<32x32xf32, #tpu.memory_space<vmem>>, %arg3: memref<32x16xf32, #tpu.memory_space<vmem>>, %arg4: memref<16x128xf32, #tpu.memory_space<vmem>>, %arg5: memref<8x128xf32, #tpu.memory_space<vmem>>) attributes {dimension_semantics = [#tpu.dimension_semantics<parallel>], iteration_bounds = array<i64: 2>, scalar_prefetch = 0 : i64, scratch_operands = 0 : i64, tpu.core_type = #tpu.core_type<tc>, window_params = [{transform_indices = @transform_0, window_bounds = array<i64: 8, 32>}, {pipeline_mode = #tpu.pipeline_mode<synchronous>, transform_indices = @transform_1, window_bounds = array<i64: 32, 32>}, {pipeline_mode = #tpu.pipeline_mode<synchronous>, transform_indices = @transform_2, window_bounds = array<i64: 32, 16>}, {pipeline_mode = #tpu.pipeline_mode<synchronous>, transform_indices = @transform_3, window_bounds = array<i64: 16, 128>}, {transform_indices = @transform_4, window_bounds = array<i64: 8, 128>}]} {
    %c0 = arith.constant 0 : index
    %c0_0 = arith.constant 0 : index
    %0 = vector.load %arg1[%c0, %c0_0] : memref<8x32xf32, #tpu.memory_space<vmem>>, vector<8x32xf32>
    %c0_1 = arith.constant 0 : index
    %c0_2 = arith.constant 0 : index
    %1 = vector.load %arg2[%c0_1, %c0_2] : memref<32x32xf32, #tpu.memory_space<vmem>>, vector<32x32xf32>
    %cst = arith.constant dense<0.000000e+00> : vector<8x32xf32>
    %2 = tpu.matmul %0, %1, %cst {dimension_numbers = #tpu.dot_dimension_numbers<[1], [0], [0], [1], [0, 0, 1, 1], [], []>} : vector<8x32xf32>, vector<32x32xf32>, vector<8x32xf32> -> vector<8x32xf32>
    %cst_3 = arith.constant 0.707106769 : f32
    %3 = vector.broadcast %cst_3 : f32 to vector<8x32xf32>
    %4 = arith.mulf %2, %3 : vector<8x32xf32>
    %5 = math.erf %4 : vector<8x32xf32>
    %cst_4 = arith.constant 1.000000e+00 : f32
    %6 = vector.broadcast %cst_4 : f32 to vector<8x32xf32>
    %7 = arith.addf %6, %5 : vector<8x32xf32>
    %8 = arith.mulf %2, %7 : vector<8x32xf32>
    %c0_5 = arith.constant 0 : index
    %c0_6 = arith.constant 0 : index
    %9 = vector.load %arg3[%c0_5, %c0_6] : memref<32x16xf32, #tpu.memory_space<vmem>>, vector<32x16xf32>
    %cst_7 = arith.constant dense<0.000000e+00> : vector<8x16xf32>
    %10 = tpu.matmul %8, %9, %cst_7 {dimension_numbers = #tpu.dot_dimension_numbers<[1], [0], [0], [1], [0, 0, 1, 1], [], []>} : vector<8x32xf32>, vector<32x16xf32>, vector<8x16xf32> -> vector<8x16xf32>
    %cst_8 = arith.constant 0.707106769 : f32
    %11 = vector.broadcast %cst_8 : f32 to vector<8x16xf32>
    %12 = arith.mulf %10, %11 : vector<8x16xf32>
    %13 = math.erf %12 : vector<8x16xf32>
    %cst_9 = arith.constant 1.000000e+00 : f32
    %14 = vector.broadcast %cst_9 : f32 to vector<8x16xf32>
    %15 = arith.addf %14, %13 : vector<8x16xf32>
    %16 = arith.mulf %10, %15 : vector<8x16xf32>
    %c0_10 = arith.constant 0 : index
    %c0_11 = arith.constant 0 : index
    %17 = vector.load %arg4[%c0_10, %c0_11] : memref<16x128xf32, #tpu.memory_space<vmem>>, vector<16x128xf32>
    %cst_12 = arith.constant dense<0.000000e+00> : vector<8x128xf32>
    %18 = tpu.matmul %16, %17, %cst_12 {dimension_numbers = #tpu.dot_dimension_numbers<[1], [0], [0], [1], [0, 0, 1, 1], [], []>} : vector<8x16xf32>, vector<16x128xf32>, vector<8x128xf32> -> vector<8x128xf32>
    %cst_13 = arith.constant 5.000000e-01 : f32
    %19 = vector.broadcast %cst_13 : f32 to vector<8x128xf32>
    %20 = arith.mulf %19, %18 : vector<8x128xf32>
    %cst_14 = arith.constant 0.707106769 : f32
    %21 = vector.broadcast %cst_14 : f32 to vector<8x128xf32>
    %22 = arith.mulf %18, %21 : vector<8x128xf32>
    %23 = math.erf %22 : vector<8x128xf32>
    %cst_15 = arith.constant 1.000000e+00 : f32
    %24 = vector.broadcast %cst_15 : f32 to vector<8x128xf32>
    %25 = arith.addf %24, %23 : vector<8x128xf32>
    %26 = arith.mulf %20, %25 : vector<8x128xf32>
    %c0_16 = arith.constant 0 : index
    %c0_17 = arith.constant 0 : index
    %27 = vector.load %arg5[%c0_16, %c0_17] : memref<8x128xf32, #tpu.memory_space<vmem>>, vector<8x128xf32>
    tpu.vector_store %arg5[%c0_16, %c0_17], %26 {strides = array<i32>} : memref<8x128xf32, #tpu.memory_space<vmem>>, vector<8x128xf32>,
    return
  }
  func.func @transform_0(%arg0: i32) -> (i32, i32) {
    %c0_i32 = arith.constant 0 : i32
    %c0_i32_0 = arith.constant 0 : i32
    return %arg0, %c0_i32 : i32, i32
  }
  func.func @transform_1(%arg0: i32) -> (i32, i32) {
    %c0_i32 = arith.constant 0 : i32
    %c0_i32_0 = arith.constant 0 : i32
    %c0_i32_1 = arith.constant 0 : i32
    return %c0_i32, %c0_i32_0 : i32, i32
  }
  func.func @transform_2(%arg0: i32) -> (i32, i32) {
    %c0_i32 = arith.constant 0 : i32
    %c0_i32_0 = arith.constant 0 : i32
    %c0_i32_1 = arith.constant 0 : i32
    return %c0_i32, %c0_i32_0 : i32, i32
  }
  func.func @transform_3(%arg0: i32) -> (i32, i32) {
    %c0_i32 = arith.constant 0 : i32
    %c0_i32_0 = arith.constant 0 : i32
    %c0_i32_1 = arith.constant 0 : i32
    return %c0_i32, %c0_i32_0 : i32, i32
  }
  func.func @transform_4(%arg0: i32) -> (i32, i32) {
    %c0_i32 = arith.constant 0 : i32
    %c0_i32_0 = arith.constant 0 : i32
    return %arg0, %c0_i32 : i32, i32
  }
}

</mosaic_0001>

<llo_original>
// kernel: hierachical_mlp.1
$region0: #{hierachical_mlp.1}
  #allocation0 [shape = 'u32[]', space=smem, size = 0x4, offset = 0x4, fixed_abs, tag = 'smem constant byte address 0x4 - core index']
  #allocation1 [shape = 'u32[144,128]{1,0:T(1,128)}', space=vmem, size = 0x12000, scoped, tag = 'internal scratch']
  %s0 = inlined_call_operand.vmem [shape: f32[16,32], index: 0, kind: input, shape index: {}]
  %s1 = inlined_call_operand.vmem [shape: f32[32,32], index: 1, kind: input, shape index: {}]
  %s2 = inlined_call_operand.vmem [shape: f32[32,16], index: 2, kind: input, shape index: {}]
  %s3 = inlined_call_operand.hbm [shape: f32[16,128], index: 3, kind: input, shape index: {}]
  %s4 = inlined_call_operand.hbm [shape: f32[16,128], index: 4, kind: output, shape index: {}]
  %s5 = sld [smem:[#allocation0]]
  $region53: #{hierachical_mlp.1} parent=0
    _
  %s7 = ssub.s32 1, %s5
  %s8 = scalar_select 0, %s7, %s5
  $region1: #{hierachical_mlp.1} parent=0
    #allocation2 [shape = 'u8[8192]{0}', space=vmem, size = 0x2000, scoped, tag = 'input window, operand 3, single buffered']
    #allocation3 [shape = 's32[2]{0}', space=sflag, size = 0x8, scoped, tag = 'scoped memory for hierachical_mlp.1']
    #allocation4 [shape = 's32[2]{0}', space=sflag, size = 0x8, scoped, tag = 'scoped memory for hierachical_mlp.1']
    #allocation5 [shape = 'u8[8192]{0}', space=vmem, size = 0x2000, scoped, tag = 'output window, operand 0']
    %9 = vsyncpa [#allocation3], 0
    %10 = vsyncpa [#allocation4], 0
    %s11 = scalar_lea.sflag [#allocation4], 1
    %12 = vsyncpa %s11, 0
    loop: start=0, step=1, limit=4
    $region2: #{hierachical_mlp.1} parent=1 // loop_pre_header
      _
    $region3: #{hierachical_mlp.1} parent=1 // loop_header
      %s14 = sphi 0, %s18
      %p15 = scmp.ge.s32.totalorder %s14, 4
      %s24 = sphi 0, %s26
      %s27 = sphi 0, %s24
      %s28 = sphi 0, %s27
      %s44 = sphi 0, %s28
      %s48 = sphi 0, %s48
      %s50 = sphi 0, %s48
      %s51 = sphi 0, %s50
      %s65 = sphi 0, %s51
      %s69 = sphi 0, %s69
      %s71 = sphi 0, %s69
      %s72 = sphi 0, %s71
      %s86 = sphi 0, %s72
      %s90 = sphi 0, %s90
      %s92 = sphi 0, %s90
      %s93 = sphi 0, %s92
      %s107 = sphi 0, %s93
      %s113 = sphi 0, %s115
      %s116 = sphi 0, %s113
      %s117 = sphi 0, %s116
      %s133 = sphi 0, %s117
    $region4: #{hierachical_mlp.1} parent=1 // loop_header_branch
      %17 = sbr.rel (%p15) target = $region8
    $region5: #{hierachical_mlp.1} parent=1 // loop_body
      %s19 = ssub.s32 %s14, 1
      %s20 = ssub.s32 %s14, 2
      %s21 = sadd.s32 %s14, 1
      %s22 = ssub.s32 %s14, %s21
      %p23 = scmp.eq.s32.totalorder %s22, 0
      %s25 = sadd.s32 %s24, 1
      %s26 = scalar_select %p23, %s24, %s25
      %p29 = pneg %p23
      %p30 = scmp.eq.s32.totalorder %s14, 1
      %p31 = por %p29, %p30
      %p32 = scmp.ne.s32.totalorder %s24, %s27
      %p33 = scmp.eq.s32.totalorder %s14, 0
      %p34 = por %p32, %p33
      %p35 = scmp.ne.s32.totalorder %s24, %s27
      %p36 = scmp.eq.s32.totalorder %s19, 1
      %p37 = por %p35, %p36
      %p38 = scmp.ne.s32.totalorder %s27, %s28
      %p39 = scmp.eq.s32.totalorder %s19, 0
      %p40 = por %p38, %p39
      %p41 = scmp.ne.s32.totalorder %s27, %s28
      %p42 = scmp.eq.s32.totalorder %s20, 1
      %p43 = por %p41, %p42
      %p45 = scmp.ne.s32.totalorder %s28, %s44
      %p46 = scmp.eq.s32.totalorder %s20, 0
      %p47 = por %p45, %p46
      %s49 = sadd.s32 %s48, 1
      %p52 = scmp.eq.s32.totalorder %s14, 1
      %p53 = scmp.ne.s32.totalorder %s48, %s50
      %p54 = scmp.eq.s32.totalorder %s14, 0
      %p55 = por %p53, %p54
      %p56 = scmp.ne.s32.totalorder %s48, %s50
      %p57 = scmp.eq.s32.totalorder %s19, 1
      %p58 = por %p56, %p57
      %p59 = scmp.ne.s32.totalorder %s50, %s51
      %p60 = scmp.eq.s32.totalorder %s19, 0
      %p61 = por %p59, %p60
      %p62 = scmp.ne.s32.totalorder %s50, %s51
      %p63 = scmp.eq.s32.totalorder %s20, 1
      %p64 = por %p62, %p63
      %p66 = scmp.ne.s32.totalorder %s51, %s65
      %p67 = scmp.eq.s32.totalorder %s20, 0
      %p68 = por %p66, %p67
      %s70 = sadd.s32 %s69, 1
      %p73 = scmp.eq.s32.totalorder %s14, 1
      %p74 = scmp.ne.s32.totalorder %s69, %s71
      %p75 = scmp.eq.s32.totalorder %s14, 0
      %p76 = por %p74, %p75
      %p77 = scmp.ne.s32.totalorder %s69, %s71
      %p78 = scmp.eq.s32.totalorder %s19, 1
      %p79 = por %p77, %p78
      %p80 = scmp.ne.s32.totalorder %s71, %s72
      %p81 = scmp.eq.s32.totalorder %s19, 0
      %p82 = por %p80, %p81
      %p83 = scmp.ne.s32.totalorder %s71, %s72
      %p84 = scmp.eq.s32.totalorder %s20, 1
      %p85 = por %p83, %p84
      %p87 = scmp.ne.s32.totalorder %s72, %s86
      %p88 = scmp.eq.s32.totalorder %s20, 0
      %p89 = por %p87, %p88
      %s91 = sadd.s32 %s90, 1
      %p94 = scmp.eq.s32.totalorder %s14, 1
      %p95 = scmp.ne.s32.totalorder %s90, %s92
      %p96 = scmp.eq.s32.totalorder %s14, 0
      %p97 = por %p95, %p96
      %p98 = scmp.ne.s32.totalorder %s90, %s92
      %p99 = scmp.eq.s32.totalorder %s19, 1
      %p100 = por %p98, %p99
      %p101 = scmp.ne.s32.totalorder %s92, %s93
      %p102 = scmp.eq.s32.totalorder %s19, 0
      %p103 = por %p101, %p102
      %p104 = scmp.ne.s32.totalorder %s92, %s93
      %p105 = scmp.eq.s32.totalorder %s20, 1
      %p106 = por %p104, %p105
      %p108 = scmp.ne.s32.totalorder %s93, %s107
      %p109 = scmp.eq.s32.totalorder %s20, 0
      %p110 = por %p108, %p109
      %s111 = ssub.s32 %s14, %s21
      %p112 = scmp.eq.s32.totalorder %s111, 0
      %s114 = sadd.s32 %s113, 1
      %s115 = scalar_select %p112, %s113, %s114
      %p118 = pneg %p112
      %p119 = scmp.eq.s32.totalorder %s14, 1
      %p120 = por %p118, %p119
      %p121 = scmp.ne.s32.totalorder %s113, %s116
      %p122 = scmp.eq.s32.totalorder %s14, 0
      %p123 = por %p121, %p122
      %p124 = scmp.ne.s32.totalorder %s113, %s116
      %p125 = scmp.eq.s32.totalorder %s19, 1
      %p126 = por %p124, %p125
      %p127 = scmp.ne.s32.totalorder %s116, %s117
      %p128 = scmp.eq.s32.totalorder %s19, 0
      %p129 = por %p127, %p128
      %p130 = scmp.ne.s32.totalorder %s116, %s117
      %p131 = scmp.eq.s32.totalorder %s20, 1
      %p132 = por %p130, %p131
      %p134 = scmp.ne.s32.totalorder %s117, %s133
      %p135 = scmp.eq.s32.totalorder %s20, 0
      %p136 = por %p134, %p135
      %p137 = scmp.le.s32.totalorder 1, %s14
      %p138 = scmp.lt.s32.totalorder %s14, 3
      %p139 = pnand %p137, %p138
      %p140 = pneg %p139
      // Predicated region
      $region9: #{hierachical_mlp.1} parent=5 // pred_check
        _
      $region10: #{hierachical_mlp.1} parent=5 // pred_check_branch
        %142 = sbr.rel (%p139) target = $region12
      $region11: #{hierachical_mlp.1} parent=5 // pred_region
        %s143 = ssub.s32 %s14, 1
        // Predicated region
        $region13: #{hierachical_mlp.1} parent=11 // pred_check
          %p144 = pneg %p61
        $region14: #{hierachical_mlp.1} parent=11 // pred_check_branch
          %146 = sbr.rel (%p144) target = $region16
        $region15: #{hierachical_mlp.1} parent=11 // pred_region
          _
        $region16: #{hierachical_mlp.1} parent=11 // pred_fallthru
          _
        // Predicated region
        $region17: #{hierachical_mlp.1} parent=11 // pred_check
          %p147 = pneg %p82
        $region18: #{hierachical_mlp.1} parent=11 // pred_check_branch
          %149 = sbr.rel (%p147) target = $region20
        $region19: #{hierachical_mlp.1} parent=11 // pred_region
          _
        $region20: #{hierachical_mlp.1} parent=11 // pred_fallthru
          _
        // Predicated region
        $region21: #{hierachical_mlp.1} parent=11 // pred_check
          %p150 = pneg %p103
        $region22: #{hierachical_mlp.1} parent=11 // pred_check_branch
          %152 = sbr.rel (%p150) target = $region24
        $region23: #{hierachical_mlp.1} parent=11 // pred_region
          %s154 = ssub.s32 256, 256
          %155 = vsyncadd [#allocation3], %s154
          %s156 = sshll.u32 [#allocation2], 4
          %s157 = int_to_ptr.vmem [resolvable:$true] %s156
          %162 = dma.hbm_to_vmem [thread:$0]  %s3, 256, %s157, [#allocation3], 128, 128, 8
        $region24: #{hierachical_mlp.1} parent=11 // pred_fallthru
          _
      $region12: #{hierachical_mlp.1} parent=5 // pred_fallthru
        _
      %p163 = scmp.lt.s32.totalorder %s14, 2
      // Predicated region
      $region25: #{hierachical_mlp.1} parent=5 // pred_check
        %p164 = pneg %p163
      $region26: #{hierachical_mlp.1} parent=5 // pred_check_branch
        %166 = sbr.rel (%p164) target = $region28
      $region27: #{hierachical_mlp.1} parent=5 // pred_region
        // Predicated region
        $region29: #{hierachical_mlp.1} parent=27 // pred_check
          %p167 = pneg %p34
        $region30: #{hierachical_mlp.1} parent=27 // pred_check_branch
          %169 = sbr.rel (%p167) target = $region32
        $region31: #{hierachical_mlp.1} parent=27 // pred_region
          %p170 = scmp.lt.s32.totalorder %s14, 1
          %s171 = scalar_select %p170, %s14, 1
          %s172 = smul.addr %s171, 8
          %s173 = scalar_lea.vmem %s0, %s172
        $region32: #{hierachical_mlp.1} parent=27 // pred_fallthru
          _
      $region28: #{hierachical_mlp.1} parent=5 // pred_fallthru
        _
      %p174 = scmp.le.s32.totalorder 1, %s14
      %p175 = scmp.lt.s32.totalorder %s14, 3
      %p176 = pnand %p174, %p175
      %p177 = pneg %p176
      // Predicated region
      $region33: #{hierachical_mlp.1} parent=5 // pred_check
        _
      $region34: #{hierachical_mlp.1} parent=5 // pred_check_branch
        %179 = sbr.rel (%p176) target = $region36
      $region35: #{hierachical_mlp.1} parent=5 // pred_region
        %s180 = ssub.s32 %s14, 1
        // Predicated region
        $region37: #{hierachical_mlp.1} parent=35 // pred_check
          %p181 = pneg %p103
        $region38: #{hierachical_mlp.1} parent=35 // pred_check_branch
          %183 = sbr.rel (%p181) target = $region40
        $region39: #{hierachical_mlp.1} parent=35 // pred_region
          %184 = dma.done [#allocation3], 256
        $region40: #{hierachical_mlp.1} parent=35 // pred_fallthru
          _
        %p185 = scmp.lt.s32.totalorder %s19, 1
        %s186 = scalar_select %p185, %s19, 1
        %s187 = smul.addr %s186, 8
        %s188 = scalar_lea.vmem %s0, %s187
        %p189 = pneg %p40
        %p190 = pneg %p37
        %p191 = pneg %p61
        %p192 = pneg %p58
        %p193 = pneg %p82
        %p194 = pneg %p79
        %p195 = pneg %p103
        %p196 = pneg %p100
        %p197 = pneg %p129
        %p198 = pneg %p126
        %s199 = sand.u32 %s116, 1
        %s200 = scalar_lea.sflag [#allocation4], %s199
        %s201 = sand.u32 %s116, 1
        %s202 = smul.addr %s201, 8
        %s203 = scalar_lea.vmem [#allocation5], %s202
        %p204 = scmp.lt.s32.totalorder %s19, 1
        %s205 = scalar_select %p204, %s19, 1
        %s206 = smul.addr %s205, 8
        %s207 = scalar_lea.vmem %s0, %s206
        %v208 = vld [vmem:[%s207] sm:$0xff]
        %v209 = vld [vmem:[%s1] sm:$0xff]
        %v210 = vld [vmem:[%s1 + $0x8] sm:$0xff]
        %v211 = vld [vmem:[%s1 + $0x10] sm:$0xff]
        %v212 = vld [vmem:[%s1 + $0x18] sm:$0xff]
        %vm213 = vcmask 261120
        %v215 = vsel %vm213, %v208, 0
        %217 = vmatprep.subr.mxu0 0.0
        %218 = vmatpush1.msra.mxu0 0.0
        %219 = vmatprep.subr.mxu0 0.0
        %220 = vmatpush1.msra.mxu0 0.0
        %221 = vmatprep.subr.mxu0 0.0
        %222 = vmatpush1.msra.mxu0 0.0
        %223 = vmatprep.subr.mxu0 0.0
        %224 = vmatpush1.msra.mxu0 0.0
        %225 = vmatprep.subr.mxu0 0.0
        %226 = vmatpush1.msra.mxu0 0.0
        %227 = vmatprep.subr.mxu0 0.0
        %228 = vmatpush1.msra.mxu0 0.0
        %229 = vmatprep.subr.mxu0 0.0
        %230 = vmatpush1.msra.mxu0 0.0
        %231 = vmatprep.subr.mxu0 0.0
        %232 = vmatpush1.msra.mxu0 0.0
        %233 = vmatprep.subr.mxu0 0.0
        %234 = vmatpush1.msra.mxu0 0.0
        %235 = vmatprep.subr.mxu0 0.0
        %236 = vmatpush1.msra.mxu0 0.0
        %237 = vmatprep.subr.mxu0 0.0
        %238 = vmatpush1.msra.mxu0 0.0
        %239 = vmatprep.subr.mxu0 0.0
        %240 = vmatpush1.msra.mxu0 0.0
        %241 = vmatprep.subr.mxu0 0.0
        %242 = vmatpush1.msra.mxu0 %v212
        %243 = vmatprep.subr.mxu0 0.0
        %244 = vmatpush1.msra.mxu0 %v211
        %245 = vmatprep.subr.mxu0 0.0
        %246 = vmatpush1.msra.mxu0 %v210
        %247 = vmatprep.subr.mxu0 0.0
        %248 = vmatpush1.msra.mxu0 %v209
        %249 = vmatprep.subr.mxu0 0.0
        %250 = vmatpush2.msra.mxu0 0.0
        %251 = vmatprep.subr.mxu0 0.0
        %252 = vmatpush2.msra.mxu0 0.0
        %253 = vmatprep.subr.mxu0 0.0
        %254 = vmatpush2.msra.mxu0 0.0
        %255 = vmatprep.subr.mxu0 0.0
        %256 = vmatpush2.msra.mxu0 0.0
        %257 = vmatprep.subr.mxu0 0.0
        %258 = vmatpush2.msra.mxu0 0.0
        %259 = vmatprep.subr.mxu0 0.0
        %260 = vmatpush2.msra.mxu0 0.0
        %261 = vmatprep.subr.mxu0 0.0
        %262 = vmatpush2.msra.mxu0 0.0
        %263 = vmatprep.subr.mxu0 0.0
        %264 = vmatpush2.msra.mxu0 0.0
        %265 = vmatprep.subr.mxu0 0.0
        %266 = vmatpush2.msra.mxu0 0.0
        %267 = vmatprep.subr.mxu0 0.0
        %268 = vmatpush2.msra.mxu0 0.0
        %269 = vmatprep.subr.mxu0 0.0
        %270 = vmatpush2.msra.mxu0 0.0
        %271 = vmatprep.subr.mxu0 0.0
        %272 = vmatpush2.msra.mxu0 0.0
        %273 = vmatprep.subr.mxu0 0.0
        %274 = vmatpush2.msra.mxu0 0.0
        %275 = vmatprep.subr.mxu0 0.0
        %276 = vmatpush2.msra.mxu0 0.0
        %277 = vmatprep.subr.mxu0 0.0
        %278 = vmatpush2.msra.mxu0 0.0
        %279 = vmatprep.subr.mxu0 0.0
        %280 = vmatpush2.msra.mxu0 0.0
        %281 = vmatprep.mubr.f32.mxu0 0.0
        %282 = vmatmul.mubr.f32.gmra.mxu0 %v215
        %v283 = vpop.f32.mrf.mxu0
        %v284 = vadd.f32 0.0, %v283
        %v285 = vpop.f32.mrf.mxu0
        %286 = vdwg.mxu0
        %v287 = vmul.f32 %v284, 0.70710677
        %v288 = verf.f32.pop %v287
        %v289 = vadd.f32 %v288, 1.0
        %v290 = vmul.f32 %v284, %v289
        %v291 = vld [vmem:[%s2] sm:$0xff]
        %v292 = vld [vmem:[%s2 + $0x8] sm:$0xff]
        %v293 = vld [vmem:[%s2 + $0x10] sm:$0xff]
        %v294 = vld [vmem:[%s2 + $0x18] sm:$0xff]
        %v296 = vsel %vm213, %v290, 0
        %298 = vmatprep.subr.mxu0 0.0
        %299 = vmatpush1.msra.mxu0 0.0
        %300 = vmatprep.subr.mxu0 0.0
        %301 = vmatpush1.msra.mxu0 0.0
        %302 = vmatprep.subr.mxu0 0.0
        %303 = vmatpush1.msra.mxu0 0.0
        %304 = vmatprep.subr.mxu0 0.0
        %305 = vmatpush1.msra.mxu0 0.0
        %306 = vmatprep.subr.mxu0 0.0
        %307 = vmatpush1.msra.mxu0 0.0
        %308 = vmatprep.subr.mxu0 0.0
        %309 = vmatpush1.msra.mxu0 0.0
        %310 = vmatprep.subr.mxu0 0.0
        %311 = vmatpush1.msra.mxu0 0.0
        %312 = vmatprep.subr.mxu0 0.0
        %313 = vmatpush1.msra.mxu0 0.0
        %314 = vmatprep.subr.mxu0 0.0
        %315 = vmatpush1.msra.mxu0 0.0
        %316 = vmatprep.subr.mxu0 0.0
        %317 = vmatpush1.msra.mxu0 0.0
        %318 = vmatprep.subr.mxu0 0.0
        %319 = vmatpush1.msra.mxu0 0.0
        %320 = vmatprep.subr.mxu0 0.0
        %321 = vmatpush1.msra.mxu0 0.0
        %322 = vmatprep.subr.mxu0 0.0
        %323 = vmatpush1.msra.mxu0 %v294
        %324 = vmatprep.subr.mxu0 0.0
        %325 = vmatpush1.msra.mxu0 %v293
        %326 = vmatprep.subr.mxu0 0.0
        %327 = vmatpush1.msra.mxu0 %v292
        %328 = vmatprep.subr.mxu0 0.0
        %329 = vmatpush1.msra.mxu0 %v291
        %330 = vmatprep.subr.mxu0 0.0
        %331 = vmatpush2.msra.mxu0 0.0
        %332 = vmatprep.subr.mxu0 0.0
        %333 = vmatpush2.msra.mxu0 0.0
        %334 = vmatprep.subr.mxu0 0.0
        %335 = vmatpush2.msra.mxu0 0.0
        %336 = vmatprep.subr.mxu0 0.0
        %337 = vmatpush2.msra.mxu0 0.0
        %338 = vmatprep.subr.mxu0 0.0
        %339 = vmatpush2.msra.mxu0 0.0
        %340 = vmatprep.subr.mxu0 0.0
        %341 = vmatpush2.msra.mxu0 0.0
        %342 = vmatprep.subr.mxu0 0.0
        %343 = vmatpush2.msra.mxu0 0.0
        %344 = vmatprep.subr.mxu0 0.0
        %345 = vmatpush2.msra.mxu0 0.0
        %346 = vmatprep.subr.mxu0 0.0
        %347 = vmatpush2.msra.mxu0 0.0
        %348 = vmatprep.subr.mxu0 0.0
        %349 = vmatpush2.msra.mxu0 0.0
        %350 = vmatprep.subr.mxu0 0.0
        %351 = vmatpush2.msra.mxu0 0.0
        %352 = vmatprep.subr.mxu0 0.0
        %353 = vmatpush2.msra.mxu0 0.0
        %354 = vmatprep.subr.mxu0 0.0
        %355 = vmatpush2.msra.mxu0 0.0
        %356 = vmatprep.subr.mxu0 0.0
        %357 = vmatpush2.msra.mxu0 0.0
        %358 = vmatprep.subr.mxu0 0.0
        %359 = vmatpush2.msra.mxu0 0.0
        %360 = vmatprep.subr.mxu0 0.0
        %361 = vmatpush2.msra.mxu0 0.0
        %362 = vmatprep.mubr.f32.mxu0 0.0
        %363 = vmatmul.mubr.f32.gmra.mxu0 %v296
        %v364 = vpop.f32.mrf.mxu0
        %v365 = vadd.f32 0.0, %v364
        %v366 = vpop.f32.mrf.mxu0
        %367 = vdwg.mxu0
        %v368 = vmul.f32 %v365, 0.70710677
        %v369 = verf.f32.pop %v368
        %v370 = vadd.f32 %v369, 1.0
        %v371 = vmul.f32 %v365, %v370
        %v372 = vld [vmem:[#allocation2] sm:$0xff]
        %v373 = vld [vmem:[#allocation2 + $0x8] sm:$0xff]
        %vm374 = vcmask 130048
        %v376 = vsel %vm374, %v371, 0
        %378 = vmatprep.subr.mxu0 0.0
        %379 = vmatpush1.msra.mxu0 0.0
        %380 = vmatprep.subr.mxu0 0.0
        %381 = vmatpush1.msra.mxu0 0.0
        %382 = vmatprep.subr.mxu0 0.0
        %383 = vmatpush1.msra.mxu0 0.0
        %384 = vmatprep.subr.mxu0 0.0
        %385 = vmatpush1.msra.mxu0 0.0
        %386 = vmatprep.subr.mxu0 0.0
        %387 = vmatpush1.msra.mxu0 0.0
        %388 = vmatprep.subr.mxu0 0.0
        %389 = vmatpush1.msra.mxu0 0.0
        %390 = vmatprep.subr.mxu0 0.0
        %391 = vmatpush1.msra.mxu0 0.0
        %392 = vmatprep.subr.mxu0 0.0
        %393 = vmatpush1.msra.mxu0 0.0
        %394 = vmatprep.subr.mxu0 0.0
        %395 = vmatpush1.msra.mxu0 0.0
        %396 = vmatprep.subr.mxu0 0.0
        %397 = vmatpush1.msra.mxu0 0.0
        %398 = vmatprep.subr.mxu0 0.0
        %399 = vmatpush1.msra.mxu0 0.0
        %400 = vmatprep.subr.mxu0 0.0
        %401 = vmatpush1.msra.mxu0 0.0
        %402 = vmatprep.subr.mxu0 0.0
        %403 = vmatpush1.msra.mxu0 0.0
        %404 = vmatprep.subr.mxu0 0.0
        %405 = vmatpush1.msra.mxu0 0.0
        %406 = vmatprep.subr.mxu0 0.0
        %407 = vmatpush1.msra.mxu0 %v373
        %408 = vmatprep.subr.mxu0 0.0
        %409 = vmatpush1.msra.mxu0 %v372
        %410 = vmatprep.subr.mxu0 0.0
        %411 = vmatpush2.msra.mxu0 0.0
        %412 = vmatprep.subr.mxu0 0.0
        %413 = vmatpush2.msra.mxu0 0.0
        %414 = vmatprep.subr.mxu0 0.0
        %415 = vmatpush2.msra.mxu0 0.0
        %416 = vmatprep.subr.mxu0 0.0
        %417 = vmatpush2.msra.mxu0 0.0
        %418 = vmatprep.subr.mxu0 0.0
        %419 = vmatpush2.msra.mxu0 0.0
        %420 = vmatprep.subr.mxu0 0.0
        %421 = vmatpush2.msra.mxu0 0.0
        %422 = vmatprep.subr.mxu0 0.0
        %423 = vmatpush2.msra.mxu0 0.0
        %424 = vmatprep.subr.mxu0 0.0
        %425 = vmatpush2.msra.mxu0 0.0
        %426 = vmatprep.subr.mxu0 0.0
        %427 = vmatpush2.msra.mxu0 0.0
        %428 = vmatprep.subr.mxu0 0.0
        %429 = vmatpush2.msra.mxu0 0.0
        %430 = vmatprep.subr.mxu0 0.0
        %431 = vmatpush2.msra.mxu0 0.0
        %432 = vmatprep.subr.mxu0 0.0
        %433 = vmatpush2.msra.mxu0 0.0
        %434 = vmatprep.subr.mxu0 0.0
        %435 = vmatpush2.msra.mxu0 0.0
        %436 = vmatprep.subr.mxu0 0.0
        %437 = vmatpush2.msra.mxu0 0.0
        %438 = vmatprep.subr.mxu0 0.0
        %439 = vmatpush2.msra.mxu0 0.0
        %440 = vmatprep.subr.mxu0 0.0
        %441 = vmatpush2.msra.mxu0 0.0
        %442 = vmatprep.mubr.f32.mxu0 0.0
        %443 = vmatmul.mubr.f32.gmra.mxu0 %v376
        %v444 = vpop.f32.mrf.mxu0
        %v445 = vadd.f32 0.0, %v444
        %v446 = vpop.f32.mrf.mxu0
        %447 = vdwg.mxu0
        %v448 = vmul.f32 %v445, 0.5
        %v449 = vmul.f32 %v445, 0.70710677
        %v450 = verf.f32.pop %v449
        %v451 = vadd.f32 %v450, 1.0
        %v452 = vmul.f32 %v448, %v451
        %453 = vst [vmem:[%s203] sm:$0xff] %v452
        %s454 = sand.u32 %s116, 1
        %s455 = scalar_lea.sflag [#allocation4], %s454
        %s456 = sand.u32 %s116, 1
        %s457 = smul.addr %s456, 8
        %s458 = scalar_lea.vmem [#allocation5], %s457
        // Predicated region
        $region41: #{hierachical_mlp.1} parent=35 // pred_check
          %p459 = pneg %p126
        $region42: #{hierachical_mlp.1} parent=35 // pred_check_branch
          %461 = sbr.rel (%p459) target = $region44
        $region43: #{hierachical_mlp.1} parent=35 // pred_region
          %s463 = ssub.s32 128, 128
          %464 = vsyncadd %s455, %s463
          %s465 = smul.addr %s19, 128
          %s466 = scalar_lea.hbm %s4, %s465
          %s468 = sshll.u32 %s458, 4
          %s469 = int_to_ptr.vmem [resolvable:$true] %s468
          %471 = dma.vmem_to_hbm [thread:$0]  %s469, 128, %s466, %s455
        $region44: #{hierachical_mlp.1} parent=35 // pred_fallthru
          _
      $region36: #{hierachical_mlp.1} parent=5 // pred_fallthru
        _
      %p472 = scmp.le.s32.totalorder 2, %s14
      // Predicated region
      $region45: #{hierachical_mlp.1} parent=5 // pred_check
        %p473 = pneg %p472
      $region46: #{hierachical_mlp.1} parent=5 // pred_check_branch
        %475 = sbr.rel (%p473) target = $region48
      $region47: #{hierachical_mlp.1} parent=5 // pred_region
        %s476 = ssub.s32 %s14, 2
        // Predicated region
        $region49: #{hierachical_mlp.1} parent=47 // pred_check
          %p477 = pneg %p132
        $region50: #{hierachical_mlp.1} parent=47 // pred_check_branch
          %479 = sbr.rel (%p477) target = $region52
        $region51: #{hierachical_mlp.1} parent=47 // pred_region
          %s480 = sand.u32 %s117, 1
          %s481 = scalar_lea.sflag [#allocation4], %s480
          %s482 = sand.u32 %s117, 1
          %s483 = smul.addr %s482, 8
          %s484 = scalar_lea.vmem [#allocation5], %s483
          %485 = dma.done %s481, 128
        $region52: #{hierachical_mlp.1} parent=47 // pred_fallthru
          _
      $region48: #{hierachical_mlp.1} parent=5 // pred_fallthru
        _
    $region6: #{hierachical_mlp.1} parent=1 // loop_footer
      %s18 = sadd.s32 1, %s14
    $region7: #{hierachical_mlp.1} parent=1 // loop_footer_branch
      %13 = sbr.rel target = $region3
    $region8: #{hierachical_mlp.1} parent=1 // loop_exit
      _
    %486 = vsyncpa [#allocation3], 1
    %s487 = scalar_lea.sflag [#allocation3], 1
    %488 = vsyncpa %s487, 1
    %489 = vsyncpa [#allocation4], 1
    %s490 = scalar_lea.sflag [#allocation4], 1
    %491 = vsyncpa %s490, 1

</llo_original>
